<compile_context>
chip_gen: v7x
topology: tpu7x:2x2x1
jax: 0.10.0
libtpu: 0.0.40
codegen_flags: <defaults>
</compile_context>

<pallas_src>
import functools

import jax
import jax.numpy as jnp
from jax.experimental import pallas as pl
from jax.experimental.pallas import tpu as pltpu

ALPHA = 0.9
_LANE = 128
_BLOCK_BYTES = 4 * 1024 * 1024          # per-block VMEM buffer budget (~4 MiB)
_VMEM_LIMIT = 32 * 1024 * 1024          # 2 bufs x (in + out) x 4 MiB = 16 MiB < 32 MiB


def _fwd_kernel(x_ref, o_ref):
    x = x_ref[...]
    # scaling = 1 where x >= 0 else alpha  ->  x * scaling
    o_ref[...] = jnp.where(x >= 0, x, x * ALPHA)


def _rev_kernel(x_ref, o_ref):
    x = x_ref[...]
    # x / scaling  (true divide by alpha for the negative branch)
    o_ref[...] = jnp.where(x >= 0, x, x / ALPHA)


def _pick_block_rows(rows, lane, itemsize):
    """Byte-budgeted, sublane-pack-aligned row-block size with >=2-4 grid steps."""
    pack = max(8, 32 // itemsize)                      # 8 f32, 16 bf16, 32 int8/fp8
    budget_rows = max(pack, (_BLOCK_BYTES // (lane * itemsize)) // pack * pack)
    if rows <= pack:
        return rows                                    # block == full dim: always legal
    # Aim for ~4 grid steps so v7x's two TCs both get work and DMA pipelines;
    # cap at the byte budget for large inputs.
    quarter = -(-rows // 4)                            # cdiv(rows, 4)
    quarter = -(-quarter // pack) * pack               # round up to sublane pack
    return min(budget_rows, quarter)


def _run_2d(kernel, x2d):
    rows, lane = x2d.shape
    itemsize = jnp.dtype(x2d.dtype).itemsize
    block_rows = _pick_block_rows(rows, lane, itemsize)
    grid = (pl.cdiv(rows, block_rows),)
    return pl.pallas_call(
        kernel,
        out_shape=jax.ShapeDtypeStruct((rows, lane), x2d.dtype),
        grid_spec=pltpu.PrefetchScalarGridSpec(
            num_scalar_prefetch=0,
            grid=grid,
            in_specs=[pl.BlockSpec((block_rows, lane), lambda i: (i, 0))],
            out_specs=pl.BlockSpec((block_rows, lane), lambda i: (i, 0)),
        ),
        compiler_params=pltpu.CompilerParams(
            dimension_semantics=("parallel",),
            vmem_limit_bytes=_VMEM_LIMIT,
        ),
    )(x2d)


def _run_elementwise(kernel, x):
    orig_shape = x.shape
    n = x.size
    if n == 0:
        return x
    itemsize = jnp.dtype(x.dtype).itemsize

    if n % _LANE == 0:
        # Common case: lane-dense (rows, 128) slab; reshape is a free bitcast
        # under jit, unmasked full-width stores in the kernel.
        out2d = _run_2d(kernel, x.reshape(-1, _LANE))
        return out2d.reshape(orig_shape)

    last = orig_shape[-1] if x.ndim else 1
    if last * itemsize <= _BLOCK_BYTES // 8:
        # Ragged total size: view as (-1, last_dim).  Block covers the full
        # last dim (always legal), HBM traffic stays contiguous, and we avoid
        # the pad + trailing-slice round-trips entirely.
        out2d = _run_2d(kernel, x.reshape(-1, last))
        return out2d.reshape(orig_shape)

    # Pathological fallback: huge last dim that is not 128-aligned.
    pad = (-n) % _LANE
    xf = jnp.pad(x.reshape(-1), (0, pad))
    out = _run_2d(kernel, xf.reshape(-1, _LANE))
    return out.reshape(-1)[:n].reshape(orig_shape)


@functools.partial(jax.jit, static_argnames=("reverse",))
def inv_leaky_relu(x, reverse=False):
    """Pallas implementation of InvLeakyRelu.forward / .reverse.

    forward: returns (x * scaling, 0.0) where scaling = 1 if x>=0 else alpha
    reverse: returns x / scaling
    """
    if reverse:
        return _run_elementwise(_rev_kernel, x)
    h = _run_elementwise(_fwd_kernel, x)
    return h, 0.0  # logdet is the constant 0.0, matching the PyTorch module


def _reference_forward(x):
    scaling = (x >= 0).astype(x.dtype) + (x < 0).astype(x.dtype) * ALPHA
    return x * scaling


if __name__ == "__main__":
    key = jax.random.PRNGKey(0)

    # Main check: shape consistent with the module (NCHW).
    x = jax.random.normal(key, (2, 4, 16, 16), dtype=jnp.float32)

    h, logdet = inv_leaky_relu(x, reverse=False)
    h = jax.block_until_ready(h)
    assert jnp.allclose(h, _reference_forward(x), atol=1e-6), "forward mismatch"
    assert logdet == 0.0

    x_rec = jax.block_until_ready(inv_leaky_relu(h, reverse=True))
    assert jnp.allclose(x_rec, x, atol=1e-5), "reverse mismatch"

    # Ragged-shape check: numel % 128 != 0 exercises the (-1, last_dim) path.
    key2 = jax.random.PRNGKey(1)
    y = jax.random.normal(key2, (2, 3, 17, 13), dtype=jnp.float32)
    hy, _ = inv_leaky_relu(y, reverse=False)
    hy = jax.block_until_ready(hy)
    assert jnp.allclose(hy, _reference_forward(y), atol=1e-6), "ragged forward mismatch"
    y_rec = jax.block_until_ready(inv_leaky_relu(hy, reverse=True))
    assert jnp.allclose(y_rec, y, atol=1e-5), "ragged reverse mismatch"

    print("KERNEL_OK")
</pallas_src>

<mosaic_0001>
module attributes {stable_mosaic.version = 11 : i64} {
  func.func @_fwd_kernel(%arg0: i32, %arg1: memref<8x128xf32, #tpu.memory_space<vmem>>, %arg2: memref<8x128xf32, #tpu.memory_space<vmem>>) attributes {dimension_semantics = [#tpu.dimension_semantics<parallel>], iteration_bounds = array<i64: 2>, scalar_prefetch = 0 : i64, scratch_operands = 0 : i64, tpu.core_type = #tpu.core_type<tc>, window_params = [{transform_indices = @transform_0, window_bounds = array<i64: 8, 128>}, {transform_indices = @transform_1, window_bounds = array<i64: 8, 128>}]} {
    %c0 = arith.constant 0 : index
    %c0_0 = arith.constant 0 : index
    %0 = vector.load %arg1[%c0, %c0_0] : memref<8x128xf32, #tpu.memory_space<vmem>>, vector<8x128xf32>
    %cst = arith.constant 0.000000e+00 : f32
    %1 = vector.broadcast %cst : f32 to vector<8x128xf32>
    %2 = arith.cmpf oge, %0, %1 : vector<8x128xf32>
    %cst_1 = arith.constant 0.899999976 : f32
    %3 = vector.broadcast %cst_1 : f32 to vector<8x128xf32>
    %4 = arith.mulf %0, %3 : vector<8x128xf32>
    %5 = arith.select %2, %0, %4 : vector<8x128xi1>, vector<8x128xf32>
    %c0_2 = arith.constant 0 : index
    %c0_3 = arith.constant 0 : index
    %6 = vector.load %arg2[%c0_2, %c0_3] : memref<8x128xf32, #tpu.memory_space<vmem>>, vector<8x128xf32>
    tpu.vector_store %arg2[%c0_2, %c0_3], %5 {strides = array<i32>} : memref<8x128xf32, #tpu.memory_space<vmem>>, vector<8x128xf32>,
    return
  }
  func.func @transform_0(%arg0: i32) -> (i32, i32) {
    %c0_i32 = arith.constant 0 : i32
    %c0_i32_0 = arith.constant 0 : i32
    return %arg0, %c0_i32 : i32, i32
  }
  func.func @transform_1(%arg0: i32) -> (i32, i32) {
    %c0_i32 = arith.constant 0 : i32
    %c0_i32_0 = arith.constant 0 : i32
    return %arg0, %c0_i32 : i32, i32
  }
}

</mosaic_0001>

<llo_original>
// kernel: inv_leaky_relu.1
$region0: #{inv_leaky_relu.1}
  #allocation0 [shape = 'u32[]', space=smem, size = 0x4, offset = 0x4, fixed_abs, tag = 'smem constant byte address 0x4 - core index']
  #allocation1 [shape = 'u32[144,128]{1,0:T(1,128)}', space=vmem, size = 0x12000, scoped, tag = 'internal scratch']
  %s0 = inlined_call_operand.vmem [shape: f32[16,128], index: 0, kind: input, shape index: {}]
  %s1 = inlined_call_operand.vmem [shape: f32[16,128], index: 1, kind: output, shape index: {}]
  %s2 = sld [smem:[#allocation0]]
  $region37: #{inv_leaky_relu.1} parent=0
    _
  %s4 = ssub.s32 1, %s2
  %s5 = scalar_select 0, %s4, %s2
  loop: start=0, step=1, limit=4
  $region2: #{inv_leaky_relu.1} parent=0 // loop_pre_header
    _
  $region3: #{inv_leaky_relu.1} parent=0 // loop_header
    %s7 = sphi 0, %s11
    %p8 = scmp.ge.s32.totalorder %s7, 4
    %s17 = sphi 0, %s19
    %s20 = sphi 0, %s17
    %s21 = sphi 0, %s20
    %s37 = sphi 0, %s21
    %s43 = sphi 0, %s45
    %s46 = sphi 0, %s43
    %s47 = sphi 0, %s46
    %s63 = sphi 0, %s47
  $region4: #{inv_leaky_relu.1} parent=0 // loop_header_branch
    %10 = sbr.rel (%p8) target = $region8
  $region5: #{inv_leaky_relu.1} parent=0 // loop_body
    %s12 = ssub.s32 %s7, 1
    %s13 = ssub.s32 %s7, 2
    %s14 = sadd.s32 %s7, 1
    %s15 = ssub.s32 %s7, %s14
    %p16 = scmp.eq.s32.totalorder %s15, 0
    %s18 = sadd.s32 %s17, 1
    %s19 = scalar_select %p16, %s17, %s18
    %p22 = pneg %p16
    %p23 = scmp.eq.s32.totalorder %s7, 1
    %p24 = por %p22, %p23
    %p25 = scmp.ne.s32.totalorder %s17, %s20
    %p26 = scmp.eq.s32.totalorder %s7, 0
    %p27 = por %p25, %p26
    %p28 = scmp.ne.s32.totalorder %s17, %s20
    %p29 = scmp.eq.s32.totalorder %s12, 1
    %p30 = por %p28, %p29
    %p31 = scmp.ne.s32.totalorder %s20, %s21
    %p32 = scmp.eq.s32.totalorder %s12, 0
    %p33 = por %p31, %p32
    %p34 = scmp.ne.s32.totalorder %s20, %s21
    %p35 = scmp.eq.s32.totalorder %s13, 1
    %p36 = por %p34, %p35
    %p38 = scmp.ne.s32.totalorder %s21, %s37
    %p39 = scmp.eq.s32.totalorder %s13, 0
    %p40 = por %p38, %p39
    %s41 = ssub.s32 %s7, %s14
    %p42 = scmp.eq.s32.totalorder %s41, 0
    %s44 = sadd.s32 %s43, 1
    %s45 = scalar_select %p42, %s43, %s44
    %p48 = pneg %p42
    %p49 = scmp.eq.s32.totalorder %s7, 1
    %p50 = por %p48, %p49
    %p51 = scmp.ne.s32.totalorder %s43, %s46
    %p52 = scmp.eq.s32.totalorder %s7, 0
    %p53 = por %p51, %p52
    %p54 = scmp.ne.s32.totalorder %s43, %s46
    %p55 = scmp.eq.s32.totalorder %s12, 1
    %p56 = por %p54, %p55
    %p57 = scmp.ne.s32.totalorder %s46, %s47
    %p58 = scmp.eq.s32.totalorder %s12, 0
    %p59 = por %p57, %p58
    %p60 = scmp.ne.s32.totalorder %s46, %s47
    %p61 = scmp.eq.s32.totalorder %s13, 1
    %p62 = por %p60, %p61
    %p64 = scmp.ne.s32.totalorder %s47, %s63
    %p65 = scmp.eq.s32.totalorder %s13, 0
    %p66 = por %p64, %p65
    %p67 = scmp.le.s32.totalorder 1, %s7
    %p68 = scmp.lt.s32.totalorder %s7, 3
    %p69 = pnand %p67, %p68
    %p70 = pneg %p69
    // Predicated region
    $region9: #{inv_leaky_relu.1} parent=5 // pred_check
      _
    $region10: #{inv_leaky_relu.1} parent=5 // pred_check_branch
      %72 = sbr.rel (%p69) target = $region12
    $region11: #{inv_leaky_relu.1} parent=5 // pred_region
      %s73 = ssub.s32 %s7, 1
    $region12: #{inv_leaky_relu.1} parent=5 // pred_fallthru
      _
    %p74 = scmp.lt.s32.totalorder %s7, 2
    // Predicated region
    $region13: #{inv_leaky_relu.1} parent=5 // pred_check
      %p75 = pneg %p74
    $region14: #{inv_leaky_relu.1} parent=5 // pred_check_branch
      %77 = sbr.rel (%p75) target = $region16
    $region15: #{inv_leaky_relu.1} parent=5 // pred_region
      // Predicated region
      $region17: #{inv_leaky_relu.1} parent=15 // pred_check
        %p78 = pneg %p27
      $region18: #{inv_leaky_relu.1} parent=15 // pred_check_branch
        %80 = sbr.rel (%p78) target = $region20
      $region19: #{inv_leaky_relu.1} parent=15 // pred_region
        %p81 = scmp.lt.s32.totalorder %s7, 1
        %s82 = scalar_select %p81, %s7, 1
        %s83 = smul.addr %s82, 8
        %s84 = scalar_lea.vmem %s0, %s83
      $region20: #{inv_leaky_relu.1} parent=15 // pred_fallthru
        _
    $region16: #{inv_leaky_relu.1} parent=5 // pred_fallthru
      _
    %p85 = scmp.le.s32.totalorder 1, %s7
    %p86 = scmp.lt.s32.totalorder %s7, 3
    %p87 = pnand %p85, %p86
    %p88 = pneg %p87
    // Predicated region
    $region21: #{inv_leaky_relu.1} parent=5 // pred_check
      _
    $region22: #{inv_leaky_relu.1} parent=5 // pred_check_branch
      %90 = sbr.rel (%p87) target = $region24
    $region23: #{inv_leaky_relu.1} parent=5 // pred_region
      %s91 = ssub.s32 %s7, 1
      %p92 = scmp.lt.s32.totalorder %s12, 1
      %s93 = scalar_select %p92, %s12, 1
      %s94 = smul.addr %s93, 8
      %s95 = scalar_lea.vmem %s0, %s94
      %p96 = pneg %p33
      %p97 = pneg %p30
      %p98 = pneg %p59
      %p99 = pneg %p56
      %p100 = scmp.lt.s32.totalorder %s12, 1
      %s101 = scalar_select %p100, %s12, 1
      %s102 = smul.addr %s101, 8
      %s103 = scalar_lea.vmem %s1, %s102
      %p104 = scmp.lt.s32.totalorder %s12, 1
      %s105 = scalar_select %p104, %s12, 1
      %s106 = smul.addr %s105, 8
      %s107 = scalar_lea.vmem %s0, %s106
      %p108 = scmp.lt.s32.totalorder %s12, 1
      %s109 = scalar_select %p108, %s12, 1
      %s110 = smul.addr %s109, 8
      %s111 = scalar_lea.vmem %s1, %s110
      %v112 = vld [vmem:[%s107] sm:$0xff]
      %vm113 = vcmp.ge.f32.partialorder %v112, 0.0
      %v114 = vmul.f32 %v112, 0.9
      %v115 = vsel %vm113, %v112, %v114
      %116 = vst [vmem:[%s111] sm:$0xff] %v115
      %p117 = scmp.lt.s32.totalorder %s12, 1
      %s118 = scalar_select %p117, %s12, 1
      %s119 = smul.addr %s118, 8
      %s120 = scalar_lea.vmem %s1, %s119
      // Predicated region
      $region25: #{inv_leaky_relu.1} parent=23 // pred_check
        %p121 = pneg %p56
      $region26: #{inv_leaky_relu.1} parent=23 // pred_check_branch
        %123 = sbr.rel (%p121) target = $region28
      $region27: #{inv_leaky_relu.1} parent=23 // pred_region
        _
      $region28: #{inv_leaky_relu.1} parent=23 // pred_fallthru
        _
    $region24: #{inv_leaky_relu.1} parent=5 // pred_fallthru
      _
    %p124 = scmp.le.s32.totalorder 2, %s7
    // Predicated region
    $region29: #{inv_leaky_relu.1} parent=5 // pred_check
      %p125 = pneg %p124
    $region30: #{inv_leaky_relu.1} parent=5 // pred_check_branch
      %127 = sbr.rel (%p125) target = $region32
    $region31: #{inv_leaky_relu.1} parent=5 // pred_region
      %s128 = ssub.s32 %s7, 2
      // Predicated region
      $region33: #{inv_leaky_relu.1} parent=31 // pred_check
        %p129 = pneg %p62
      $region34: #{inv_leaky_relu.1} parent=31 // pred_check_branch
        %131 = sbr.rel (%p129) target = $region36
      $region35: #{inv_leaky_relu.1} parent=31 // pred_region
        %p132 = scmp.lt.s32.totalorder %s13, 1
        %s133 = scalar_select %p132, %s13, 1
        %s134 = smul.addr %s133, 8
        %s135 = scalar_lea.vmem %s1, %s134
      $region36: #{inv_leaky_relu.1} parent=31 // pred_fallthru
        _
    $region32: #{inv_leaky_relu.1} parent=5 // pred_fallthru
      _
  $region6: #{inv_leaky_relu.1} parent=0 // loop_footer
    %s11 = sadd.s32 1, %s7
  $region7: #{inv_leaky_relu.1} parent=0 // loop_footer_branch
    %6 = sbr.rel target = $region3
  $region8: #{inv_leaky_relu.1} parent=0 // loop_exit
    _

</llo_original>
